<compile_context>
chip_gen: v5e
topology: v5e:2x2
jax: 0.10.0
libtpu: 0.0.40
codegen_flags: <defaults>
</compile_context>

<pallas_src>
import math

import jax
import jax.numpy as jnp
from jax import lax
from jax.experimental import pallas as pl
from jax.experimental.pallas import tpu as pltpu


def _build_pe_table(d_model: int, max_len: int = 10) -> jnp.ndarray:
    """Sin/cos positional-encoding table, shape (max_len, d_model), float32."""
    position = jnp.arange(0, max_len, dtype=jnp.float32)[:, None]            # (L, 1)
    div_term = jnp.exp(
        jnp.arange(0, d_model, 2, dtype=jnp.float32) * (-math.log(10000.0) / d_model)
    )                                                                          # (D/2,)
    pe = jnp.zeros((max_len, d_model), dtype=jnp.float32)
    pe = pe.at[:, 0::2].set(jnp.sin(position * div_term))
    pe = pe.at[:, 1::2].set(jnp.cos(position * div_term))
    return pe


def _pe_add_kernel(x_ref, pe_ref, o_ref):
    # x_ref / o_ref: (TILE_M, W) VMEM blocks; pe_ref: (1, W) row broadcast over
    # the sublane axis.  Pure VPU add -> kernel is HBM-bandwidth bound.
    o_ref[...] = x_ref[...] + pe_ref[...]


def _largest_divisor_tile(m_rows: int, target: int) -> int:
    """Largest divisor of m_rows that is a multiple of 8 and <= target (0 if none)."""
    best = 0
    d = 1
    while d * d <= m_rows:
        if m_rows % d == 0:
            for t in (d, m_rows // d):
                if t % 8 == 0 and t <= target and t > best:
                    best = t
        d += 1
    return best


def _choose_tile_rows(m_rows: int, width: int, itemsize: int,
                      vmem_budget_bytes: int = 12 * 1024 * 1024) -> int:
    """Pick a row tile: large enough to amortize the ~0.35 us per-grid-step
    overhead, small enough that (x in + out) x double-buffering fits a
    conservative VMEM budget (v5e default scoped VMEM is only 16 MiB)."""
    if width % 128 != 0:
        return m_rows  # can't tile legally; fall back to a single full block
    bytes_per_row = 4 * width * itemsize  # 2 pipelined operands x 2 buffers each
    max_rows = max(8, vmem_budget_bytes // bytes_per_row)
    target = min(max_rows, 1024, m_rows)
    target -= target % 8
    if target < 8:
        return m_rows
    tile = _largest_divisor_tile(m_rows, target)
    return tile if tile > 0 else m_rows


def positional_encoding_add(x: jnp.ndarray, pe: jnp.ndarray, iter_idx) -> jnp.ndarray:
    """x: (B, S, D); pe: (max_len, D); iter_idx: scalar int.  Returns x + pe[iter_idx]."""
    B, S, D = x.shape
    max_len, d_model = pe.shape
    assert d_model == D
    itemsize = jnp.dtype(x.dtype).itemsize

    # --- select the single PE row outside the kernel (ships 1 x D, not max_len x D) ---
    idx = jnp.asarray(iter_idx, dtype=jnp.int32)
    pe_row = lax.dynamic_slice(pe, (idx, 0), (1, D)).astype(x.dtype)          # (1, D)

    # --- flatten (B, S); fold rows so the lane (last) dim is a multiple of 128 ---
    M = B * S
    x_flat = x.reshape(M, D)
    fold = 1 if D % 128 == 0 else 128 // math.gcd(D, 128)
    m_pad = ((M + fold - 1) // fold) * fold
    if m_pad != M:
        x_flat = jnp.pad(x_flat, ((0, m_pad - M), (0, 0)))
    m2, w = m_pad // fold, fold * D
    x2 = x_flat.reshape(m2, w)
    pe_row2 = jnp.tile(pe_row, (1, fold))                                     # (1, W)

    # --- tile the row axis in large, VMEM-safe blocks ---
    tile_m = _choose_tile_rows(m2, w, itemsize)
    grid = (m2 // tile_m,)

    out2 = pl.pallas_call(
        _pe_add_kernel,
        out_shape=jax.ShapeDtypeStruct((m2, w), x.dtype),
        grid=grid,
        in_specs=[
            pl.BlockSpec((tile_m, w), lambda m: (m, 0)),      # x row tile
            pl.BlockSpec((1, w), lambda m: (0, 0)),           # single PE row, resident
        ],
        out_specs=pl.BlockSpec((tile_m, w), lambda m: (m, 0)),
        compiler_params=pltpu.CompilerParams(
            dimension_semantics=("parallel",)),                # shards across v7x's 2 TCs
        cost_estimate=pl.CostEstimate(
            flops=M * D,
            transcendentals=0,
            bytes_accessed=(2 * M * D + D) * itemsize),
    )(x2, pe_row2)

    out = out2.reshape(m_pad, D)[:M]
    return out.reshape(B, S, D)


if __name__ == "__main__":
    key = jax.random.PRNGKey(0)

    B, S, D = 2, 8, 32          # batch, seq, d_model
    MAX_LEN = 10
    ITER_IDX = 3

    x = jax.random.normal(key, (B, S, D), dtype=jnp.float32)
    pe = _build_pe_table(D, MAX_LEN)

    out = positional_encoding_add(x, pe, ITER_IDX)
    out = jax.block_until_ready(out)

    # Reference check (mirrors x + self.pe[:, iter_idx, :].unsqueeze(1))
    ref = x + pe[ITER_IDX][None, None, :]
    assert out.shape == x.shape and out.dtype == x.dtype
    assert jnp.allclose(out, ref, atol=1e-6), "mismatch vs reference"

    print("KERNEL_OK")
</pallas_src>

<mosaic_0001>
module attributes {stable_mosaic.version = 11 : i64} {
  func.func @_pe_add_kernel(%arg0: i32, %arg1: memref<4x128xf32, #tpu.memory_space<vmem>>, %arg2: memref<1x128xf32, #tpu.memory_space<vmem>>, %arg3: memref<4x128xf32, #tpu.memory_space<vmem>>) attributes {dimension_semantics = [#tpu.dimension_semantics<parallel>], iteration_bounds = array<i64: 1>, scalar_prefetch = 0 : i64, scratch_operands = 0 : i64, tpu.core_type = #tpu.core_type<tc>, window_params = [{transform_indices = @transform_0, window_bounds = array<i64: 4, 128>}, {pipeline_mode = #tpu.pipeline_mode<synchronous>, transform_indices = @transform_1, window_bounds = array<i64: 1, 128>}, {transform_indices = @transform_2, window_bounds = array<i64: 4, 128>}]} {
    %c0 = arith.constant 0 : index
    %c0_0 = arith.constant 0 : index
    %0 = vector.load %arg1[%c0, %c0_0] : memref<4x128xf32, #tpu.memory_space<vmem>>, vector<4x128xf32>
    %c0_1 = arith.constant 0 : index
    %c0_2 = arith.constant 0 : index
    %1 = vector.load %arg2[%c0_1, %c0_2] : memref<1x128xf32, #tpu.memory_space<vmem>>, vector<1x128xf32>
    %2 = vector.broadcast %1 : vector<1x128xf32> to vector<4x128xf32>
    %3 = arith.addf %0, %2 : vector<4x128xf32>
    %c0_3 = arith.constant 0 : index
    %c0_4 = arith.constant 0 : index
    %4 = vector.load %arg3[%c0_3, %c0_4] : memref<4x128xf32, #tpu.memory_space<vmem>>, vector<4x128xf32>
    tpu.vector_store %arg3[%c0_3, %c0_4], %3 {strides = array<i32>} : memref<4x128xf32, #tpu.memory_space<vmem>>, vector<4x128xf32>,
    return
  }
  func.func @transform_0(%arg0: i32) -> (i32, i32) {
    %c0_i32 = arith.constant 0 : i32
    %c0_i32_0 = arith.constant 0 : i32
    return %arg0, %c0_i32 : i32, i32
  }
  func.func @transform_1(%arg0: i32) -> (i32, i32) {
    %c0_i32 = arith.constant 0 : i32
    %c0_i32_0 = arith.constant 0 : i32
    %c0_i32_1 = arith.constant 0 : i32
    return %c0_i32, %c0_i32_0 : i32, i32
  }
  func.func @transform_2(%arg0: i32) -> (i32, i32) {
    %c0_i32 = arith.constant 0 : i32
    %c0_i32_0 = arith.constant 0 : i32
    return %arg0, %c0_i32 : i32, i32
  }
}

</mosaic_0001>

<llo_original>
// kernel: tpu_custom_call.1
$region0: #{tpu_custom_call.1}
  #allocation0 [shape = 'u32[]', space=smem, size = 0x4, offset = 0x4, fixed_abs, tag = 'smem constant byte address 0x4 - core index']
  #allocation1 [shape = 'u32[72,128]{1,0:T(1,128)}', space=vmem, size = 0x9000, scoped, tag = 'internal scratch']
  %s0 = inlined_call_operand.hbm [shape: f32[4,128], index: 0, kind: input, shape index: {}]
  %s1 = inlined_call_operand.hbm [shape: f32[1,128], index: 1, kind: input, shape index: {}]
  %s2 = inlined_call_operand.hbm [shape: f32[4,128], index: 2, kind: output, shape index: {}]
  %s3 = sld [smem:[#allocation0]]
  $region26: #{tpu_custom_call.1} parent=0
    _
  %s5 = ssub.s32 1, %s3
  %s6 = scalar_select 0, %s5, %s3
  $region1: #{tpu_custom_call.1} parent=0
    #allocation2 [shape = 'u8[2048]{0}', space=vmem, size = 0x800, scoped, tag = 'input window, operand 0, single buffered']
    #allocation3 [shape = 's32[1]{0}', space=sflag, size = 0x4, scoped, tag = 'scoped memory for tpu_custom_call.1']
    #allocation4 [shape = 's32[1]{0}', space=sflag, size = 0x4, scoped, tag = 'scoped memory for tpu_custom_call.1']
    #allocation5 [shape = 'u8[512]{0}', space=vmem, size = 0x400, scoped, tag = 'input window, operand 1, single buffered']
    #allocation6 [shape = 's32[1]{0}', space=sflag, size = 0x4, scoped, tag = 'scoped memory for tpu_custom_call.1']
    #allocation7 [shape = 'u8[2048]{0}', space=vmem, size = 0x800, scoped, tag = 'output window, operand 0, single buffered']
    %7 = vsyncpa [#allocation3], 0
    %8 = vsyncpa [#allocation6], 0
    %9 = vsyncpa [#allocation4], 0
    // Predicated region
    $region2: #{tpu_custom_call.1} parent=1 // pred_check
      _
    $region3: #{tpu_custom_call.1} parent=1 // pred_check_branch
      %11 = sbr.rel (0) target = $region5
    $region4: #{tpu_custom_call.1} parent=1 // pred_region
      %13 = vsyncadd [#allocation3], 0
      %s15 = sshll.u32 %s0, 4
      %s16 = int_to_ptr.hbm [resolvable:$true] %s15
      %s17 = sshll.u32 [#allocation2], 4
      %s18 = int_to_ptr.vmem [resolvable:$true] %s17
      %20 = dma.hbm_to_vmem [thread:$0]  %s16, 64, %s18, [#allocation3]
    $region5: #{tpu_custom_call.1} parent=1 // pred_fallthru
      _
    // Predicated region
    $region6: #{tpu_custom_call.1} parent=1 // pred_check
      _
    $region7: #{tpu_custom_call.1} parent=1 // pred_check_branch
      %22 = sbr.rel (0) target = $region9
    $region8: #{tpu_custom_call.1} parent=1 // pred_region
      %24 = vsyncadd [#allocation6], 0
      %s26 = sshll.u32 %s1, 4
      %s27 = int_to_ptr.hbm [resolvable:$true] %s26
      %s28 = sshll.u32 [#allocation5], 4
      %s29 = int_to_ptr.vmem [resolvable:$true] %s28
      %31 = dma.hbm_to_vmem [thread:$0]  %s27, 16, %s29, [#allocation6]
    $region9: #{tpu_custom_call.1} parent=1 // pred_fallthru
      _
    // Predicated region
    $region10: #{tpu_custom_call.1} parent=1 // pred_check
      _
    $region11: #{tpu_custom_call.1} parent=1 // pred_check_branch
      %33 = sbr.rel (0) target = $region13
    $region12: #{tpu_custom_call.1} parent=1 // pred_region
      %35 = dma.done [#allocation3], 64
    $region13: #{tpu_custom_call.1} parent=1 // pred_fallthru
      _
    // Predicated region
    $region14: #{tpu_custom_call.1} parent=1 // pred_check
      _
    $region15: #{tpu_custom_call.1} parent=1 // pred_check_branch
      %37 = sbr.rel (0) target = $region17
    $region16: #{tpu_custom_call.1} parent=1 // pred_region
      %39 = dma.done [#allocation6], 16
    $region17: #{tpu_custom_call.1} parent=1 // pred_fallthru
      _
    %v40 = vld [vmem:[#allocation2] sm:$0xf]
    %v41 = vld [vmem:[#allocation5] sm:$0x1]
    %v43 = vperm.slane %v41, 0
    %v45 = vadd.f32 %v40, %v43
    %46 = vst [vmem:[#allocation7] sm:$0xf] %v45
    // Predicated region
    $region18: #{tpu_custom_call.1} parent=1 // pred_check
      _
    $region19: #{tpu_custom_call.1} parent=1 // pred_check_branch
      %48 = sbr.rel (0) target = $region21
    $region20: #{tpu_custom_call.1} parent=1 // pred_region
      %50 = vsyncadd [#allocation4], 0
      %s52 = sshll.u32 [#allocation7], 4
      %s53 = int_to_ptr.vmem [resolvable:$true] %s52
      %s54 = sshll.u32 %s2, 4
      %s55 = int_to_ptr.hbm [resolvable:$true] %s54
      %57 = dma.vmem_to_hbm [thread:$0]  %s53, 64, %s55, [#allocation4]
    $region21: #{tpu_custom_call.1} parent=1 // pred_fallthru
      _
    // Predicated region
    $region22: #{tpu_custom_call.1} parent=1 // pred_check
      _
    $region23: #{tpu_custom_call.1} parent=1 // pred_check_branch
      %59 = sbr.rel (0) target = $region25
    $region24: #{tpu_custom_call.1} parent=1 // pred_region
      %61 = dma.done [#allocation4], 64
    $region25: #{tpu_custom_call.1} parent=1 // pred_fallthru
      _
    %62 = vsyncpa [#allocation3], 1
    %63 = vsyncpa [#allocation6], 1
    %64 = vsyncpa [#allocation4], 1

</llo_original>
